<compile_context>
chip_gen: v7x
topology: tpu7x:2x2x1
jax: 0.10.0
libtpu: 0.0.40
codegen_flags: <defaults>
</compile_context>

<pallas_src>
import functools

import numpy as np
import jax
import jax.numpy as jnp
from jax import lax
from jax.experimental import pallas as pl
from jax.experimental.pallas import tpu as pltpu


_VMEM_LIMIT = 32 * 1024 * 1024  # explicit: lifts v5e's 16 MiB default, fits v7x's 64 MiB VMEM


def _cdiv(a, b):
    return -(-a // b)


def _window_max(x, k, axis):
    """Sliding-window max of length k along `axis` via log2 doubling.

    Output length = x.shape[axis] - k + 1; uses ~ceil(log2(k)) shift+max steps
    instead of k-1 (fewer XLU rotates / VMEM copies)."""
    if k == 1:
        return x
    acc = x
    covered = 1
    while covered < k:
        step = min(covered, k - covered)
        lo = lax.slice_in_dim(acc, 0, acc.shape[axis] - step, axis=axis)
        hi = lax.slice_in_dim(acc, step, acc.shape[axis], axis=axis)
        acc = jnp.maximum(lo, hi)
        covered += step
    return acc


def _mask_kernel(bernp_ref, mask_ref, sum_ref, *, block_size):
    """One batch image per grid step.

    bernp_ref: (1, H+2p, W+2p) zero-padded Bernoulli seed mask (f32, VMEM).
    mask_ref:  (1, H, W) un-scaled block mask (f32, VMEM).
    sum_ref:   (N,) per-batch block_mask sums (f32, SMEM, untiled)."""
    _, h, w = mask_ref.shape
    bp = bernp_ref[...]
    pooled = _window_max(bp, block_size, axis=1)      # rows
    pooled = _window_max(pooled, block_size, axis=2)  # cols
    pooled = pooled[:, :h, :w]                        # crop (handles even block_size)
    block_mask = 1.0 - pooled
    mask_ref[...] = block_mask
    sum_ref[pl.program_id(0)] = jnp.sum(block_mask)


def _apply_kernel(scale_ref, mask_ref, x_ref, o_ref):
    """scale_ref: (1,1) f32 SMEM; mask_ref: (1,1,hw_t); x_ref/o_ref: (1,c_t,hw_t)."""
    scale = scale_ref[0, 0]
    m = mask_ref[...].astype(jnp.float32) * scale
    o_ref[...] = (x_ref[...] * m).astype(o_ref.dtype)


def _choose_apply_tiles(n, c, hw, itemsize):
    """Pick (c_t, hw_t) for the apply pass: ~3 MiB x-blocks (near-roofline on
    v5e/v6e/v7x), dtype-aware sublane rounding, 128-lane-aligned HW splits when
    needed, and >=8 grid steps when shrinking tiles is free."""
    sub = {4: 8, 2: 16, 1: 32}.get(itemsize, 8)   # sublane packing per dtype
    target = 3 * 1024 * 1024
    min_block = 512 * 1024

    if sub * hw * itemsize > target and hw > 128:
        # Even `sub` channel rows exceed the target -> tile HW (lane-aligned).
        c_t = sub if c >= sub else c
        hw_t = max(128, (target // (c_t * itemsize) // 128) * 128)
        hw_t = min(hw_t, hw)
    else:
        hw_t = hw
        max_ct = max(1, target // max(1, hw * itemsize))
        c_t = c if max_ct >= c else max(sub, (max_ct // sub) * sub)

    def steps(ct, hwt):
        return n * _cdiv(c, ct) * _cdiv(hw, hwt)

    # v7x megacore / pipelining: prefer >=8 grid steps while blocks stay big
    # enough (>=512 KiB) that the kernel remains HBM-bandwidth-bound.
    while steps(c_t, hw_t) < 8 and c_t * hw_t * itemsize > min_block:
        if c_t > sub:
            c_t = max(sub, ((c_t // 2) // sub) * sub)
        elif hw_t > 128:
            hw_t = max(128, ((hw_t // 2) // 128) * 128)
        else:
            break
    return c_t, hw_t


def dropblock2d_pallas(x, key, drop_prob, block_size):
    n, c, h, w = x.shape
    hw = h * w
    pad = block_size // 2
    gamma = drop_prob / (block_size ** 2)

    # Bernoulli(gamma) seed mask, shared across channels (matches DropBlock2D).
    # TODO(synk): in-kernel pltpu.prng_seed / prng_random_bits have no
    # interpret/CPU lowering, so the seed mask is sampled with jax.random here.
    bern = jax.random.bernoulli(key, p=gamma, shape=(n, h, w)).astype(jnp.float32)
    bern_padded = jnp.pad(bern, ((0, 0), (pad, pad), (pad, pad)))

    # Kernel 1: per-image block mask + per-batch partial sums (gridded over N).
    mask, msums = pl.pallas_call(
        functools.partial(_mask_kernel, block_size=block_size),
        out_shape=(jax.ShapeDtypeStruct((n, h, w), jnp.float32),
                   jax.ShapeDtypeStruct((n,), jnp.float32)),
        grid=(n,),
        in_specs=[pl.BlockSpec((1, h + 2 * pad, w + 2 * pad), lambda b: (b, 0, 0))],
        out_specs=(pl.BlockSpec((1, h, w), lambda b: (b, 0, 0)),
                   pl.BlockSpec(memory_space=pltpu.MemorySpace.SMEM)),
        compiler_params=pltpu.CompilerParams(
            dimension_semantics=("arbitrary",),
            vmem_limit_bytes=_VMEM_LIMIT),
    )(bern_padded)

    # Batch-global rescale scalar (tiny XLA reduce over (n,)).  Zero-sum guard:
    # reference produces NaN/Inf; we return zeros (intentional deviation).
    total = jnp.sum(msums)
    numel = jnp.float32(n * hw)
    scale = jnp.where(total > 0.0, numel / jnp.maximum(total, 1.0), 0.0)
    scale = scale.astype(jnp.float32).reshape(1, 1)

    # Lane-dense layouts (free XLA reshapes).  Cast mask to x.dtype (0/1 exact)
    # to halve its DMA bytes when x is bf16/f16; rescale stays f32 in SMEM.
    mask_dtype = x.dtype if jnp.issubdtype(x.dtype, jnp.floating) else jnp.float32
    mask_l = mask.astype(mask_dtype).reshape(n, 1, hw)
    x_l = x.reshape(n, c, hw)

    itemsize = jnp.dtype(x.dtype).itemsize
    c_t, hw_t = _choose_apply_tiles(n, c, hw, itemsize)
    grid = (n, _cdiv(c, c_t), _cdiv(hw, hw_t))

    out = pl.pallas_call(
        _apply_kernel,
        out_shape=jax.ShapeDtypeStruct((n, c, hw), x.dtype),
        grid=grid,
        in_specs=[
            pl.BlockSpec(memory_space=pltpu.MemorySpace.SMEM),             # scale
            pl.BlockSpec((1, 1, hw_t), lambda b, ci, hi: (b, 0, hi)),      # mask
            pl.BlockSpec((1, c_t, hw_t), lambda b, ci, hi: (b, ci, hi)),   # x
        ],
        out_specs=pl.BlockSpec((1, c_t, hw_t), lambda b, ci, hi: (b, ci, hi)),
        compiler_params=pltpu.CompilerParams(
            dimension_semantics=("parallel", "parallel", "parallel"),
            vmem_limit_bytes=_VMEM_LIMIT),
    )(scale, mask_l, x_l)
    return out.reshape(n, c, h, w)


class DropBlock2D:
    """JAX/Pallas DropBlock2D (NCHW); identity when not training or prob==0."""

    def __init__(self, drop_prob, block_size):
        self.drop_prob = float(drop_prob)
        self.block_size = int(block_size)
        self.training = True

    def __call__(self, x, *, key=None):
        if not self.training or self.drop_prob == 0.0:
            return x
        if key is None:
            key = jax.random.PRNGKey(0)
        return dropblock2d_pallas(x, key, self.drop_prob, self.block_size)


class LinearScheduler:
    """JAX/Pallas port of RMMD's LinearScheduler (host-side schedule state)."""

    def __init__(self, dropblock, start_value, stop_value, nr_steps):
        self.dropblock = dropblock
        self.i = 0
        self.drop_values = np.linspace(start=start_value, stop=stop_value,
                                       num=int(nr_steps))

    def __call__(self, x, *, key=None):
        # forward(x) == self.dropblock(x)
        return self.dropblock(x, key=key)

    def step(self):
        if self.i < len(self.drop_values):
            self.dropblock.drop_prob = float(self.drop_values[self.i])
        self.i += 1


if __name__ == "__main__":
    root = jax.random.PRNGKey(0)
    kx, kmask = jax.random.split(root)
    x = jax.random.normal(kx, (2, 4, 16, 16), dtype=jnp.float32)

    sched = LinearScheduler(DropBlock2D(drop_prob=0.0, block_size=3),
                            start_value=0.0, stop_value=0.25, nr_steps=5)
    for _ in range(3):            # advance schedule -> drop_prob = 0.125
        sched.step()

    out = sched(x, key=kmask)
    out = jax.block_until_ready(out)
    assert out.shape == x.shape and out.dtype == x.dtype
    assert bool(jnp.all(jnp.isfinite(out)))
    print("KERNEL_OK")
</pallas_src>

<mosaic_0001>
module attributes {stable_mosaic.version = 11 : i64} {
  func.func @_mask_kernel(%arg0: i32, %arg1: memref<1x18x18xf32, #tpu.memory_space<vmem>>, %arg2: memref<1x16x16xf32, #tpu.memory_space<vmem>>, %arg3: memref<2xf32, #tpu.memory_space<smem>>) attributes {dimension_semantics = [#tpu.dimension_semantics<arbitrary>], iteration_bounds = array<i64: 2>, scalar_prefetch = 0 : i64, scratch_operands = 0 : i64, tpu.core_type = #tpu.core_type<tc>, window_params = [{transform_indices = @transform_0, window_bounds = array<i64: 1, 18, 18>}, {transform_indices = @transform_1, window_bounds = array<i64: 1, 16, 16>}, {transform_indices = @transform_2, window_bounds = array<i64: 2>}]} {
    %c0 = arith.constant 0 : index
    %c0_0 = arith.constant 0 : index
    %c0_1 = arith.constant 0 : index
    %0 = vector.load %arg1[%c0, %c0_0, %c0_1] : memref<1x18x18xf32, #tpu.memory_space<vmem>>, vector<1x18x18xf32>
    %1 = vector.extract_strided_slice %0 {offsets = [0, 0, 0], sizes = [1, 17, 18], strides = [1, 1, 1]} : vector<1x18x18xf32> to vector<1x17x18xf32>
    %2 = vector.extract_strided_slice %0 {offsets = [0, 1, 0], sizes = [1, 17, 18], strides = [1, 1, 1]} : vector<1x18x18xf32> to vector<1x17x18xf32>
    %3 = arith.maximumf %1, %2 : vector<1x17x18xf32>
    %4 = vector.extract_strided_slice %3 {offsets = [0, 0, 0], sizes = [1, 16, 18], strides = [1, 1, 1]} : vector<1x17x18xf32> to vector<1x16x18xf32>
    %5 = vector.extract_strided_slice %3 {offsets = [0, 1, 0], sizes = [1, 16, 18], strides = [1, 1, 1]} : vector<1x17x18xf32> to vector<1x16x18xf32>
    %6 = arith.maximumf %4, %5 : vector<1x16x18xf32>
    %7 = vector.extract_strided_slice %6 {offsets = [0, 0, 0], sizes = [1, 16, 17], strides = [1, 1, 1]} : vector<1x16x18xf32> to vector<1x16x17xf32>
    %8 = vector.extract_strided_slice %6 {offsets = [0, 0, 1], sizes = [1, 16, 17], strides = [1, 1, 1]} : vector<1x16x18xf32> to vector<1x16x17xf32>
    %9 = arith.maximumf %7, %8 : vector<1x16x17xf32>
    %10 = vector.extract_strided_slice %9 {offsets = [0, 0, 0], sizes = [1, 16, 16], strides = [1, 1, 1]} : vector<1x16x17xf32> to vector<1x16x16xf32>
    %11 = vector.extract_strided_slice %9 {offsets = [0, 0, 1], sizes = [1, 16, 16], strides = [1, 1, 1]} : vector<1x16x17xf32> to vector<1x16x16xf32>
    %12 = arith.maximumf %10, %11 : vector<1x16x16xf32>
    %cst = arith.constant 1.000000e+00 : f32
    %13 = vector.broadcast %cst : f32 to vector<1x16x16xf32>
    %14 = arith.subf %13, %12 : vector<1x16x16xf32>
    %c0_2 = arith.constant 0 : index
    %c0_3 = arith.constant 0 : index
    %c0_4 = arith.constant 0 : index
    %15 = vector.load %arg2[%c0_2, %c0_3, %c0_4] : memref<1x16x16xf32, #tpu.memory_space<vmem>>, vector<1x16x16xf32>
    tpu.vector_store %arg2[%c0_2, %c0_3, %c0_4], %14 {strides = array<i32>} : memref<1x16x16xf32, #tpu.memory_space<vmem>>, vector<1x16x16xf32>,
    %16 = vector.shape_cast %14 : vector<1x16x16xf32> to vector<1x1x16x16xf32>
    %cst_5 = arith.constant dense<0.000000e+00> : vector<1xf32>
    %17 = vector.multi_reduction <add>, %16, %cst_5 [1, 2, 3] : vector<1x1x16x16xf32> to vector<1xf32>
    %18 = vector.shape_cast %17 : vector<1xf32> to vector<1x1x1x1xf32>
    %19 = vector.extract %18[0, 0, 0, 0] : f32 from vector<1x1x1x1xf32>
    %20 = arith.index_cast %arg0 : i32 to index
    %21 = memref.load %arg3[%20] : memref<2xf32, #tpu.memory_space<smem>>
    memref.store %19, %arg3[%20] : memref<2xf32, #tpu.memory_space<smem>>
    return
  }
  func.func @transform_0(%arg0: i32) -> (i32, i32, i32) {
    %c0_i32 = arith.constant 0 : i32
    %c0_i32_0 = arith.constant 0 : i32
    %c0_i32_1 = arith.constant 0 : i32
    return %arg0, %c0_i32, %c0_i32_0 : i32, i32, i32
  }
  func.func @transform_1(%arg0: i32) -> (i32, i32, i32) {
    %c0_i32 = arith.constant 0 : i32
    %c0_i32_0 = arith.constant 0 : i32
    %c0_i32_1 = arith.constant 0 : i32
    return %arg0, %c0_i32, %c0_i32_0 : i32, i32, i32
  }
  func.func @transform_2(%arg0: i32) -> i32 {
    %c0_i32 = arith.constant 0 : i32
    %c0_i32_0 = arith.constant 0 : i32
    return %c0_i32 : i32
  }
}

</mosaic_0001>

<llo_original>
// kernel: tpu_custom_call.1
$region0: #{tpu_custom_call.1}
  #allocation0 [shape = 'u32[]', space=smem, size = 0x4, offset = 0x4, fixed_abs, tag = 'smem constant byte address 0x4 - core index']
  #allocation1 [shape = 'u32[144,128]{1,0:T(1,128)}', space=vmem, size = 0x12000, scoped, tag = 'internal scratch']
  %s0 = inlined_call_operand.vmem [shape: f32[2,18,18], index: 0, kind: input, shape index: {}]
  %s1 = inlined_call_operand.hbm [shape: f32[2,16,16], index: 1, kind: output, shape index: {0}]
  %s2 = inlined_call_operand.hbm [shape: f32[2], index: 2, kind: output, shape index: {1}]
  %3 = xla_tuple %s1, %s2
  %s4 = sld [smem:[#allocation0]]
  $region45: #{tpu_custom_call.1} parent=0
    _
  %s6 = ssub.s32 1, %s4
  %s7 = scalar_select 0, %s6, %s4
  $region1: #{tpu_custom_call.1} parent=0
    #allocation2 [shape = 'u8[16384]{0}', space=vmem, size = 0x4000, scoped, tag = 'output window, operand 0']
    #allocation3 [shape = 's32[2]{0}', space=sflag, size = 0x8, scoped, tag = 'scoped memory for tpu_custom_call.1']
    #allocation4 [shape = 's32[2]{0}', space=sflag, size = 0x8, scoped, tag = 'scoped memory for tpu_custom_call.1']
    #allocation5 [shape = 'u8[512]{0}', space=smem, size = 0x200, scoped, tag = 'output window, operand 1, single buffered']
    %8 = vsyncpa [#allocation3], 0
    %s9 = scalar_lea.sflag [#allocation3], 1
    %10 = vsyncpa %s9, 0
    %11 = vsyncpa [#allocation4], 0
    loop: start=0, step=1, limit=4
    $region2: #{tpu_custom_call.1} parent=1 // loop_pre_header
      _
    $region3: #{tpu_custom_call.1} parent=1 // loop_header
      %s13 = sphi 0, %s17
      %p14 = scmp.ge.s32.totalorder %s13, 4
      %s23 = sphi 0, %s25
      %s26 = sphi 0, %s23
      %s27 = sphi 0, %s26
      %s43 = sphi 0, %s27
      %s49 = sphi 0, %s51
      %s52 = sphi 0, %s49
      %s53 = sphi 0, %s52
      %s69 = sphi 0, %s53
      %s73 = sphi 0, %s73
      %s75 = sphi 0, %s73
      %s76 = sphi 0, %s75
      %s90 = sphi 0, %s76
    $region4: #{tpu_custom_call.1} parent=1 // loop_header_branch
      %16 = sbr.rel (%p14) target = $region8
    $region5: #{tpu_custom_call.1} parent=1 // loop_body
      %s18 = ssub.s32 %s13, 1
      %s19 = ssub.s32 %s13, 2
      %s20 = sadd.s32 %s13, 1
      %s21 = ssub.s32 %s13, %s20
      %p22 = scmp.eq.s32.totalorder %s21, 0
      %s24 = sadd.s32 %s23, 1
      %s25 = scalar_select %p22, %s23, %s24
      %p28 = pneg %p22
      %p29 = scmp.eq.s32.totalorder %s13, 1
      %p30 = por %p28, %p29
      %p31 = scmp.ne.s32.totalorder %s23, %s26
      %p32 = scmp.eq.s32.totalorder %s13, 0
      %p33 = por %p31, %p32
      %p34 = scmp.ne.s32.totalorder %s23, %s26
      %p35 = scmp.eq.s32.totalorder %s18, 1
      %p36 = por %p34, %p35
      %p37 = scmp.ne.s32.totalorder %s26, %s27
      %p38 = scmp.eq.s32.totalorder %s18, 0
      %p39 = por %p37, %p38
      %p40 = scmp.ne.s32.totalorder %s26, %s27
      %p41 = scmp.eq.s32.totalorder %s19, 1
      %p42 = por %p40, %p41
      %p44 = scmp.ne.s32.totalorder %s27, %s43
      %p45 = scmp.eq.s32.totalorder %s19, 0
      %p46 = por %p44, %p45
      %s47 = ssub.s32 %s13, %s20
      %p48 = scmp.eq.s32.totalorder %s47, 0
      %s50 = sadd.s32 %s49, 1
      %s51 = scalar_select %p48, %s49, %s50
      %p54 = pneg %p48
      %p55 = scmp.eq.s32.totalorder %s13, 1
      %p56 = por %p54, %p55
      %p57 = scmp.ne.s32.totalorder %s49, %s52
      %p58 = scmp.eq.s32.totalorder %s13, 0
      %p59 = por %p57, %p58
      %p60 = scmp.ne.s32.totalorder %s49, %s52
      %p61 = scmp.eq.s32.totalorder %s18, 1
      %p62 = por %p60, %p61
      %p63 = scmp.ne.s32.totalorder %s52, %s53
      %p64 = scmp.eq.s32.totalorder %s18, 0
      %p65 = por %p63, %p64
      %p66 = scmp.ne.s32.totalorder %s52, %s53
      %p67 = scmp.eq.s32.totalorder %s19, 1
      %p68 = por %p66, %p67
      %p70 = scmp.ne.s32.totalorder %s53, %s69
      %p71 = scmp.eq.s32.totalorder %s19, 0
      %p72 = por %p70, %p71
      %s74 = sadd.s32 %s73, 1
      %p77 = scmp.eq.s32.totalorder %s13, 1
      %p78 = scmp.ne.s32.totalorder %s73, %s75
      %p79 = scmp.eq.s32.totalorder %s13, 0
      %p80 = por %p78, %p79
      %p81 = scmp.ne.s32.totalorder %s73, %s75
      %p82 = scmp.eq.s32.totalorder %s18, 1
      %p83 = por %p81, %p82
      %p84 = scmp.ne.s32.totalorder %s75, %s76
      %p85 = scmp.eq.s32.totalorder %s18, 0
      %p86 = por %p84, %p85
      %p87 = scmp.ne.s32.totalorder %s75, %s76
      %p88 = scmp.eq.s32.totalorder %s19, 1
      %p89 = por %p87, %p88
      %p91 = scmp.ne.s32.totalorder %s76, %s90
      %p92 = scmp.eq.s32.totalorder %s19, 0
      %p93 = por %p91, %p92
      %p94 = scmp.le.s32.totalorder 1, %s13
      %p95 = scmp.lt.s32.totalorder %s13, 3
      %p96 = pnand %p94, %p95
      %p97 = pneg %p96
      // Predicated region
      $region9: #{tpu_custom_call.1} parent=5 // pred_check
        _
      $region10: #{tpu_custom_call.1} parent=5 // pred_check_branch
        %99 = sbr.rel (%p96) target = $region12
      $region11: #{tpu_custom_call.1} parent=5 // pred_region
        %s100 = ssub.s32 %s13, 1
      $region12: #{tpu_custom_call.1} parent=5 // pred_fallthru
        _
      %p101 = scmp.lt.s32.totalorder %s13, 2
      // Predicated region
      $region13: #{tpu_custom_call.1} parent=5 // pred_check
        %p102 = pneg %p101
      $region14: #{tpu_custom_call.1} parent=5 // pred_check_branch
        %104 = sbr.rel (%p102) target = $region16
      $region15: #{tpu_custom_call.1} parent=5 // pred_region
        // Predicated region
        $region17: #{tpu_custom_call.1} parent=15 // pred_check
          %p105 = pneg %p33
        $region18: #{tpu_custom_call.1} parent=15 // pred_check_branch
          %107 = sbr.rel (%p105) target = $region20
        $region19: #{tpu_custom_call.1} parent=15 // pred_region
          %p108 = scmp.lt.s32.totalorder %s13, 1
          %s109 = scalar_select %p108, %s13, 1
          %s110 = smul.addr %s109, 3
          %s111 = smul.addr %s110, 8
          %s112 = scalar_lea.vmem %s0, %s111
        $region20: #{tpu_custom_call.1} parent=15 // pred_fallthru
          _
      $region16: #{tpu_custom_call.1} parent=5 // pred_fallthru
        _
      %p113 = scmp.le.s32.totalorder 1, %s13
      %p114 = scmp.lt.s32.totalorder %s13, 3
      %p115 = pnand %p113, %p114
      %p116 = pneg %p115
      // Predicated region
      $region21: #{tpu_custom_call.1} parent=5 // pred_check
        _
      $region22: #{tpu_custom_call.1} parent=5 // pred_check_branch
        %118 = sbr.rel (%p115) target = $region24
      $region23: #{tpu_custom_call.1} parent=5 // pred_region
        %s119 = ssub.s32 %s13, 1
        %p120 = scmp.lt.s32.totalorder %s18, 1
        %s121 = scalar_select %p120, %s18, 1
        %s122 = smul.addr %s121, 3
        %s123 = smul.addr %s122, 8
        %s124 = scalar_lea.vmem %s0, %s123
        %p125 = pneg %p39
        %p126 = pneg %p36
        %p127 = pneg %p65
        %p128 = pneg %p62
        %s129 = sand.u32 %s52, 1
        %s130 = scalar_lea.sflag [#allocation3], %s129
        %s131 = sand.u32 %s52, 1
        %s132 = smul.addr %s131, 16
        %s133 = scalar_lea.vmem [#allocation2], %s132
        %p134 = pneg %p86
        %p135 = pneg %p83
        %p136 = scmp.lt.s32.totalorder %s18, 1
        %s137 = scalar_select %p136, %s18, 1
        %s138 = smul.addr %s137, 3
        %s139 = smul.addr %s138, 8
        %s140 = scalar_lea.vmem %s0, %s139
        %v141 = vld [vmem:[%s140] sm:$0xff]
        %v142 = vld [vmem:[%s140 + $0x8] sm:$0xff]
        %v143 = vld [vmem:[%s140 + $0x10] sm:$0x3]
        %vm147 = vcmask 1046528
        %v148 = vrot.slane %v141, 1
        %v149 = vrot.slane %v142, 1
        %v150 = vsel %vm147, %v148, %v149
        %v151 = vrot.slane %v143, 1
        %v152 = vsel %vm147, %v149, %v151
        %v156 = vmax.f32 %v141, %v150
        %v157 = vmax.f32 %v142, %v152
        %v158 = vmax.f32 %v143, %v151
        %v162 = vrot.slane %v156, 1
        %v163 = vrot.slane %v157, 1
        %v164 = vsel %vm147, %v162, %v163
        %v165 = vrot.slane %v158, 1
        %v166 = vsel %vm147, %v163, %v165
        %v169 = vmax.f32 %v156, %v164
        %v170 = vmax.f32 %v157, %v166
        %173 = vrot.lane.b32.xlu0 %v169, 127
        %v174 = vpop.permute.xlu0 %173
        %175 = vrot.lane.b32.xlu0 %v170, 127
        %v176 = vpop.permute.xlu0 %175
        %v179 = vmax.f32 %v169, %v174
        %v180 = vmax.f32 %v170, %v176
        %183 = vrot.lane.b32.xlu0 %v179, 127
        %v184 = vpop.permute.xlu0 %183
        %185 = vrot.lane.b32.xlu0 %v180, 127
        %v186 = vpop.permute.xlu0 %185
        %v189 = vmax.f32 %v179, %v184
        %v190 = vmax.f32 %v180, %v186
        %v191 = vsub.f32 1.0, %v189
        %v192 = vsub.f32 1.0, %v190
        %vm193 = vcmask 130048
        %194 = vst.msk [vmem:[%s133] sm:$0xff] %vm193, %v191
        %195 = vst.msk [vmem:[%s133 + $0x8] sm:$0xff] %vm193, %v192
        %v196 = vsel %vm193, %v191, 0.0
        %v197 = vsel %vm193, %v192, 0.0
        %v198 = vadd.f32 %v196, %v197
        %199 = vadd.xlane.f32.xlu0 %v198
        %v200 = vpop.xlane.xlu0 %199
        %v201 = vrot.slane %v200, 4
        %v202 = vadd.f32 %v200, %v201
        %v203 = vrot.slane %v202, 2
        %v204 = vadd.f32 %v202, %v203
        %v205 = vrot.slane %v204, 1
        %v206 = vadd.f32 %v204, %v205
        %s207 = vtos %v206
        %s208 = scalar_lea.smem [#allocation5], %s18
        %209 = sst [smem:[%s208]] %s207
        %s210 = sand.u32 %s52, 1
        %s211 = scalar_lea.sflag [#allocation3], %s210
        %s212 = sand.u32 %s52, 1
        %s213 = smul.addr %s212, 16
        %s214 = scalar_lea.vmem [#allocation2], %s213
        // Predicated region
        $region25: #{tpu_custom_call.1} parent=23 // pred_check
          %p215 = pneg %p62
        $region26: #{tpu_custom_call.1} parent=23 // pred_check_branch
          %217 = sbr.rel (%p215) target = $region28
        $region27: #{tpu_custom_call.1} parent=23 // pred_region
          %s219 = ssub.s32 256, 256
          %220 = vsyncadd %s211, %s219
          %s221 = smul.addr %s18, 2
          %s222 = smul.addr %s221, 128
          %s223 = scalar_lea.hbm %s1, %s222
          %s224 = sshll.u32 %s214, 4
          %s225 = int_to_ptr.vmem [resolvable:$true] %s224
          %230 = dma.vmem_to_hbm [thread:$0]  %s225, 256, %s223, %s211, 128, 128, 8
        $region28: #{tpu_custom_call.1} parent=23 // pred_fallthru
          _
        // Predicated region
        $region29: #{tpu_custom_call.1} parent=23 // pred_check
          %p231 = pneg %p83
        $region30: #{tpu_custom_call.1} parent=23 // pred_check_branch
          %233 = sbr.rel (%p231) target = $region32
        $region31: #{tpu_custom_call.1} parent=23 // pred_region
          %s235 = ssub.s32 16, 16
          %236 = vsyncadd [#allocation4], %s235
          %239 = dma.smem_to_hbm [#allocation5], 16, %s2, [#allocation4]
        $region32: #{tpu_custom_call.1} parent=23 // pred_fallthru
          _
        // Predicated region
        $region33: #{tpu_custom_call.1} parent=23 // pred_check
          %p240 = pneg %p83
        $region34: #{tpu_custom_call.1} parent=23 // pred_check_branch
          %242 = sbr.rel (%p240) target = $region36
        $region35: #{tpu_custom_call.1} parent=23 // pred_region
          %243 = dma.done [#allocation4], 16
        $region36: #{tpu_custom_call.1} parent=23 // pred_fallthru
          _
        %244 = sfence
      $region24: #{tpu_custom_call.1} parent=5 // pred_fallthru
        _
      %p245 = scmp.le.s32.totalorder 2, %s13
      // Predicated region
      $region37: #{tpu_custom_call.1} parent=5 // pred_check
        %p246 = pneg %p245
      $region38: #{tpu_custom_call.1} parent=5 // pred_check_branch
        %248 = sbr.rel (%p246) target = $region40
      $region39: #{tpu_custom_call.1} parent=5 // pred_region
        %s249 = ssub.s32 %s13, 2
        // Predicated region
        $region41: #{tpu_custom_call.1} parent=39 // pred_check
          %p250 = pneg %p68
        $region42: #{tpu_custom_call.1} parent=39 // pred_check_branch
          %252 = sbr.rel (%p250) target = $region44
        $region43: #{tpu_custom_call.1} parent=39 // pred_region
          %s253 = sand.u32 %s53, 1
          %s254 = scalar_lea.sflag [#allocation3], %s253
          %s255 = sand.u32 %s53, 1
          %s256 = smul.addr %s255, 16
          %s257 = scalar_lea.vmem [#allocation2], %s256
          %258 = dma.done %s254, 256
        $region44: #{tpu_custom_call.1} parent=39 // pred_fallthru
          _
      $region40: #{tpu_custom_call.1} parent=5 // pred_fallthru
        _
    $region6: #{tpu_custom_call.1} parent=1 // loop_footer
      %s17 = sadd.s32 1, %s13
    $region7: #{tpu_custom_call.1} parent=1 // loop_footer_branch
      %12 = sbr.rel target = $region3
    $region8: #{tpu_custom_call.1} parent=1 // loop_exit
      _
    %259 = vsyncpa [#allocation3], 1
    %s260 = scalar_lea.sflag [#allocation3], 1
    %261 = vsyncpa %s260, 1
    %262 = vsyncpa [#allocation4], 1
    %s263 = scalar_lea.sflag [#allocation4], 1
    %264 = vsyncpa %s263, 1

</llo_original>
